<compile_context>
chip_gen: v7x
topology: tpu7x:2x2x1
jax: 0.10.0
libtpu: 0.0.40
codegen_flags: <defaults>
</compile_context>

<pallas_src>
import functools

import jax
import jax.numpy as jnp
from jax.experimental import pallas as pl
from jax.experimental.pallas import tpu as pltpu


def _attention_aggregator_kernel(x_ref, w_ref, o_ref):
    # x_ref: (H, tm, Lc) tile of stacked heads (lane-folded layout).
    # w_ref: (H, Lc)     pre-softmaxed, pre-tiled per-head lane weights.
    # o_ref: (tm, Lc)
    h_total = x_ref.shape[0]
    w = w_ref[...].astype(jnp.float32)                          # (H, Lc), resident
    acc = x_ref[0].astype(jnp.float32) * w[0:1, :]              # (tm, Lc)
    for h in range(1, h_total):                                 # fully unrolled (H is small)
        acc = acc + x_ref[h].astype(jnp.float32) * w[h:h + 1, :]
    o_ref[...] = acc.astype(o_ref.dtype)


@functools.partial(jax.jit, static_argnames=("target_rows",))
def attention_aggregator(x_stacked, weights, *, target_rows=2048):
    """x_stacked: (H, B, D, L); weights: (L, H) -> (B, D, L)."""
    H, B, D, L = x_stacked.shape
    M = B * D

    # Softmax over heads, hoisted out of the kernel (computed once in the wrapper).
    sm = jax.nn.softmax(weights.astype(jnp.float32), axis=1)    # (L, H)

    # Lane folding: pack F consecutive rows into the 128-lane axis so every vector
    # load/store/VPU op is lane-dense (L is typically << 128).
    if (128 % L == 0) and (M % (128 // L) == 0):
        F = 128 // L
    else:
        F = 1                                                   # fall back to unfolded layout
    Lc = F * L
    Mf = M // F

    x2 = x_stacked.reshape(H, Mf, Lc)
    # Per-head lane weight row tiled F times: element (h, f*L + l) == sm[l, h],
    # matching the row-major folding of x above.
    w_lane = jnp.tile(jnp.transpose(sm), (1, F)).astype(jnp.float32)   # (H, Lc)

    # Row-tile size: multiple of 8, sized so one x block is ~4 MiB.
    bytes_per_row = H * Lc * x2.dtype.itemsize
    vmem_budget = 4 * 1024 * 1024
    tm_cap = max(8, (vmem_budget // max(bytes_per_row, 1)) // 8 * 8)
    tm = min(target_rows, tm_cap)

    if Mf <= tm:
        tm = Mf                                                 # full-extent block (always legal)
        pad = 0
    else:
        pad = (-Mf) % tm
        if pad:
            x2 = jnp.pad(x2, ((0, 0), (0, pad), (0, 0)))
    Mp = Mf + pad
    grid_m = Mp // tm

    out = pl.pallas_call(
        _attention_aggregator_kernel,
        out_shape=jax.ShapeDtypeStruct((Mp, Lc), x_stacked.dtype),
        grid_spec=pltpu.PrefetchScalarGridSpec(
            num_scalar_prefetch=0,
            grid=(grid_m,),
            in_specs=[
                pl.BlockSpec((H, tm, Lc), lambda i: (0, i, 0)),
                pl.BlockSpec((H, Lc), lambda i: (0, 0)),        # weights resident across grid
            ],
            out_specs=pl.BlockSpec((tm, Lc), lambda i: (i, 0)),
        ),
        compiler_params=pltpu.CompilerParams(
            dimension_semantics=("parallel",),                  # shards across TCs on v7x
        ),
    )(x2, w_lane)

    if pad:
        out = out[:Mf]
    return out.reshape(B, D, L)


def attention_aggregator_ref(x_list, weights):
    # Pure-JAX reference mirroring the PyTorch forward exactly.
    xs = jnp.stack(x_list, axis=3)                              # (B, D, L, H)
    sm = jax.nn.softmax(weights, axis=1)                        # (L, H)
    return jnp.sum(xs * sm[None, None, :, :], axis=3)           # (B, D, L)


if __name__ == "__main__":
    # Small shapes consistent with the module's forward.
    num_labels = 16   # L
    n_heads = 4       # H
    batch = 2         # B
    d1 = 8            # D (the per-example middle dim, x[0].shape[1])

    key = jax.random.PRNGKey(0)
    k_w, k_x, k_x2 = jax.random.split(key, 3)

    # Parameter init: torch.rand(num_labels, n_heads) -> uniform [0, 1).
    weights = jax.random.uniform(k_w, (num_labels, n_heads), dtype=jnp.float32)

    # The module receives a *list* of n_heads tensors, each (B, D, L).
    x_all = jax.random.normal(k_x, (n_heads, batch, d1, num_labels), dtype=jnp.float32)
    x_list = [x_all[h] for h in range(n_heads)]

    out = attention_aggregator(x_all, weights)
    out = jax.block_until_ready(out)

    ref = attention_aggregator_ref(x_list, weights)
    assert out.shape == (batch, d1, num_labels)
    assert jnp.allclose(out, ref, atol=1e-5, rtol=1e-5), "mismatch vs reference (small)"

    # Second check: larger M so the multi-tile (grid > 1) and padding paths are exercised.
    b2, d2 = 4, 512                                             # M = 2048 -> Mf = 256
    x_big = jax.random.normal(k_x2, (n_heads, b2, d2, num_labels), dtype=jnp.float32)
    out_big = jax.block_until_ready(attention_aggregator(x_big, weights, target_rows=48))
    ref_big = attention_aggregator_ref([x_big[h] for h in range(n_heads)], weights)
    assert out_big.shape == (b2, d2, num_labels)
    assert jnp.allclose(out_big, ref_big, atol=1e-5, rtol=1e-5), "mismatch vs reference (tiled)"

    print("KERNEL_OK")
</pallas_src>

<mosaic_0001>
module attributes {stable_mosaic.version = 11 : i64} {
  func.func @_attention_aggregator_kernel(%arg0: i32, %arg1: memref<4x2x128xf32, #tpu.memory_space<vmem>>, %arg2: memref<4x128xf32, #tpu.memory_space<vmem>>, %arg3: memref<2x128xf32, #tpu.memory_space<vmem>>) attributes {dimension_semantics = [#tpu.dimension_semantics<parallel>], iteration_bounds = array<i64: 1>, scalar_prefetch = 0 : i64, scratch_operands = 0 : i64, tpu.core_type = #tpu.core_type<tc>, window_params = [{transform_indices = @transform_0, window_bounds = array<i64: 4, 2, 128>}, {pipeline_mode = #tpu.pipeline_mode<synchronous>, transform_indices = @transform_1, window_bounds = array<i64: 4, 128>}, {transform_indices = @transform_2, window_bounds = array<i64: 2, 128>}]} {
    %c0 = arith.constant 0 : index
    %c0_0 = arith.constant 0 : index
    %0 = vector.load %arg2[%c0, %c0_0] : memref<4x128xf32, #tpu.memory_space<vmem>>, vector<4x128xf32>
    %c0_1 = arith.constant 0 : index
    %c0_2 = arith.constant 0 : index
    %c0_3 = arith.constant 0 : index
    %1 = vector.load %arg1[%c0_1, %c0_2, %c0_3] : memref<4x2x128xf32, #tpu.memory_space<vmem>>, vector<1x2x128xf32>
    %2 = vector.shape_cast %1 : vector<1x2x128xf32> to vector<2x128xf32>
    %3 = vector.extract_strided_slice %0 {offsets = [0, 0], sizes = [1, 128], strides = [1, 1]} : vector<4x128xf32> to vector<1x128xf32>
    %4 = vector.broadcast %3 : vector<1x128xf32> to vector<2x128xf32>
    %5 = arith.mulf %2, %4 : vector<2x128xf32>
    %c1 = arith.constant 1 : index
    %c0_4 = arith.constant 0 : index
    %c0_5 = arith.constant 0 : index
    %6 = vector.load %arg1[%c1, %c0_4, %c0_5] : memref<4x2x128xf32, #tpu.memory_space<vmem>>, vector<1x2x128xf32>
    %7 = vector.shape_cast %6 : vector<1x2x128xf32> to vector<2x128xf32>
    %8 = vector.extract_strided_slice %0 {offsets = [1, 0], sizes = [1, 128], strides = [1, 1]} : vector<4x128xf32> to vector<1x128xf32>
    %9 = vector.broadcast %8 : vector<1x128xf32> to vector<2x128xf32>
    %10 = arith.mulf %7, %9 : vector<2x128xf32>
    %11 = arith.addf %5, %10 : vector<2x128xf32>
    %c2 = arith.constant 2 : index
    %c0_6 = arith.constant 0 : index
    %c0_7 = arith.constant 0 : index
    %12 = vector.load %arg1[%c2, %c0_6, %c0_7] : memref<4x2x128xf32, #tpu.memory_space<vmem>>, vector<1x2x128xf32>
    %13 = vector.shape_cast %12 : vector<1x2x128xf32> to vector<2x128xf32>
    %14 = vector.extract_strided_slice %0 {offsets = [2, 0], sizes = [1, 128], strides = [1, 1]} : vector<4x128xf32> to vector<1x128xf32>
    %15 = vector.broadcast %14 : vector<1x128xf32> to vector<2x128xf32>
    %16 = arith.mulf %13, %15 : vector<2x128xf32>
    %17 = arith.addf %11, %16 : vector<2x128xf32>
    %c3 = arith.constant 3 : index
    %c0_8 = arith.constant 0 : index
    %c0_9 = arith.constant 0 : index
    %18 = vector.load %arg1[%c3, %c0_8, %c0_9] : memref<4x2x128xf32, #tpu.memory_space<vmem>>, vector<1x2x128xf32>
    %19 = vector.shape_cast %18 : vector<1x2x128xf32> to vector<2x128xf32>
    %20 = vector.extract_strided_slice %0 {offsets = [3, 0], sizes = [1, 128], strides = [1, 1]} : vector<4x128xf32> to vector<1x128xf32>
    %21 = vector.broadcast %20 : vector<1x128xf32> to vector<2x128xf32>
    %22 = arith.mulf %19, %21 : vector<2x128xf32>
    %23 = arith.addf %17, %22 : vector<2x128xf32>
    %c0_10 = arith.constant 0 : index
    %c0_11 = arith.constant 0 : index
    %24 = vector.load %arg3[%c0_10, %c0_11] : memref<2x128xf32, #tpu.memory_space<vmem>>, vector<2x128xf32>
    tpu.vector_store %arg3[%c0_10, %c0_11], %23 {strides = array<i32>} : memref<2x128xf32, #tpu.memory_space<vmem>>, vector<2x128xf32>,
    return
  }
  func.func @transform_0(%arg0: i32) -> (i32, i32, i32) {
    %c0_i32 = arith.constant 0 : i32
    %c0_i32_0 = arith.constant 0 : i32
    %c0_i32_1 = arith.constant 0 : i32
    return %c0_i32, %arg0, %c0_i32_0 : i32, i32, i32
  }
  func.func @transform_1(%arg0: i32) -> (i32, i32) {
    %c0_i32 = arith.constant 0 : i32
    %c0_i32_0 = arith.constant 0 : i32
    %c0_i32_1 = arith.constant 0 : i32
    return %c0_i32, %c0_i32_0 : i32, i32
  }
  func.func @transform_2(%arg0: i32) -> (i32, i32) {
    %c0_i32 = arith.constant 0 : i32
    %c0_i32_0 = arith.constant 0 : i32
    return %arg0, %c0_i32 : i32, i32
  }
}

</mosaic_0001>

<llo_original>
// kernel: tile.9
$region0: #{tile.9}
  %s0 = inlined_call_operand.vmem [shape: f32[4,8,16], index: 0, kind: input, shape index: {}]
  %s1 = inlined_call_operand.vmem [shape: f32[4,128], index: 1, kind: output, shape index: {}]
  $region1: #{tile.9} parent=0
    #allocation0 [shape = 'u8[4096]{0}', space=vmem, size = 0x1000, scoped, tag = 'scoped mem for output reshape']
    %v2 = vld [vmem:[%s0] ss:$8 sm:$0xf]
    %vm3 = vcmask 130048
    %4 = vst.msk [vmem:[#allocation0] sm:$0xf] %vm3, %v2
    %s5 = scalar_lea.vmem %s0, 7
    %v6 = vld [vmem:[%s5] ss:$8 sm:$0xf]
    %7 = vrot.lane.b32.xlu0 %v6, 112
    %v8 = vpop.permute.xlu0 %7
    %vm9 = vcmask 1048448
    %10 = vst.msk [vmem:[#allocation0] sm:$0xf] %vm9, %v8
    %s11 = scalar_lea.vmem %s0, 6
    %v12 = vld [vmem:[%s11] ss:$8 sm:$0xf]
    %13 = vrot.lane.b32.xlu0 %v12, 96
    %v14 = vpop.permute.xlu0 %13
    %vm15 = vcmask 917248
    %16 = vst.msk [vmem:[#allocation0] sm:$0xf] %vm15, %v14
    %s17 = scalar_lea.vmem %s0, 5
    %v18 = vld [vmem:[%s17] ss:$8 sm:$0xf]
    %19 = vrot.lane.b32.xlu0 %v18, 80
    %v20 = vpop.permute.xlu0 %19
    %vm21 = vcmask 786048
    %22 = vst.msk [vmem:[#allocation0] sm:$0xf] %vm21, %v20
    %s23 = scalar_lea.vmem %s0, 4
    %v24 = vld [vmem:[%s23] ss:$8 sm:$0xf]
    %25 = vrot.lane.b32.xlu0 %v24, 64
    %v26 = vpop.permute.xlu0 %25
    %vm27 = vcmask 654848
    %28 = vst.msk [vmem:[#allocation0] sm:$0xf] %vm27, %v26
    %s29 = scalar_lea.vmem %s0, 3
    %v30 = vld [vmem:[%s29] ss:$8 sm:$0xf]
    %31 = vrot.lane.b32.xlu0 %v30, 48
    %v32 = vpop.permute.xlu0 %31
    %vm33 = vcmask 523648
    %34 = vst.msk [vmem:[#allocation0] sm:$0xf] %vm33, %v32
    %s35 = scalar_lea.vmem %s0, 2
    %v36 = vld [vmem:[%s35] ss:$8 sm:$0xf]
    %37 = vrot.lane.b32.xlu0 %v36, 32
    %v38 = vpop.permute.xlu0 %37
    %vm39 = vcmask 392448
    %40 = vst.msk [vmem:[#allocation0] sm:$0xf] %vm39, %v38
    %s41 = scalar_lea.vmem %s0, 1
    %v42 = vld [vmem:[%s41] ss:$8 sm:$0xf]
    %43 = vrot.lane.b32.xlu0 %v42, 16
    %v44 = vpop.permute.xlu0 %43
    %vm45 = vcmask 261248
    %46 = vst.msk [vmem:[#allocation0] sm:$0xf] %vm45, %v44
    %s48 = sshllo.u32 0, 4
    %v50 = vld [vmem:[#allocation0] sm:%s48]
    %s51 = sshllo.u32 0, 4
    %52 = vst [vmem:[%s1] sm:%s51] %v50

// kernel: attention_aggregator.1
$region0: #{attention_aggregator.1}
  #allocation0 [shape = 'u32[]', space=smem, size = 0x4, offset = 0x4, fixed_abs, tag = 'smem constant byte address 0x4 - core index']
  #allocation1 [shape = 'u32[144,128]{1,0:T(1,128)}', space=vmem, size = 0x12000, scoped, tag = 'internal scratch']
  %s0 = inlined_call_operand.vmem [shape: f32[4,2,128], index: 0, kind: input, shape index: {}]
  %s1 = inlined_call_operand.vmem [shape: f32[4,128], index: 1, kind: input, shape index: {}]
  %s2 = inlined_call_operand.vmem [shape: f32[2,128], index: 2, kind: output, shape index: {}]
  %s3 = sld [smem:[#allocation0]]
  $region18: #{attention_aggregator.1} parent=0
    _
  %s5 = ssub.s32 1, %s3
  %s6 = scalar_select 0, %s5, %s3
  // Predicated region
  $region2: #{attention_aggregator.1} parent=0 // pred_check
    _
  $region3: #{attention_aggregator.1} parent=0 // pred_check_branch
    %8 = sbr.rel (0) target = $region5
  $region4: #{attention_aggregator.1} parent=0 // pred_region
    _
  $region5: #{attention_aggregator.1} parent=0 // pred_fallthru
    _
  // Predicated region
  $region6: #{attention_aggregator.1} parent=0 // pred_check
    _
  $region7: #{attention_aggregator.1} parent=0 // pred_check_branch
    %10 = sbr.rel (0) target = $region9
  $region8: #{attention_aggregator.1} parent=0 // pred_region
    _
  $region9: #{attention_aggregator.1} parent=0 // pred_fallthru
    _
  %v11 = vld [vmem:[%s1] sm:$0xf]
  %v12 = vld [vmem:[%s0] sm:$0x3]
  %v13 = vlaneseq
  %v14 = vshrl.u32 %v13, 7
  %v15 = vsub.s32 0, %v14
  %v16 = vrot.slane %v11, %v15
  %v17 = vmul.f32 %v12, %v16
  %s18 = scalar_lea.vmem %s0, 2
  %v19 = vld [vmem:[%s18] sm:$0x3]
  %v20 = vlaneseq
  %v21 = vshrl.u32 %v20, 7
  %v22 = vsub.s32 1, %v21
  %v23 = vrot.slane %v11, %v22
  %v24 = vmul.f32 %v19, %v23
  %v25 = vadd.f32 %v17, %v24
  %s26 = scalar_lea.vmem %s0, 4
  %v27 = vld [vmem:[%s26] sm:$0x3]
  %v28 = vlaneseq
  %v29 = vshrl.u32 %v28, 7
  %v30 = vsub.s32 2, %v29
  %v31 = vrot.slane %v11, %v30
  %v32 = vmul.f32 %v27, %v31
  %v33 = vadd.f32 %v25, %v32
  %s34 = scalar_lea.vmem %s0, 6
  %v35 = vld [vmem:[%s34] sm:$0x3]
  %v36 = vlaneseq
  %v37 = vshrl.u32 %v36, 7
  %v38 = vsub.s32 3, %v37
  %v39 = vrot.slane %v11, %v38
  %v40 = vmul.f32 %v35, %v39
  %v41 = vadd.f32 %v33, %v40
  %42 = vst [vmem:[%s2] sm:$0x3] %v41
  // Predicated region
  $region10: #{attention_aggregator.1} parent=0 // pred_check
    _
  $region11: #{attention_aggregator.1} parent=0 // pred_check_branch
    %44 = sbr.rel (0) target = $region13
  $region12: #{attention_aggregator.1} parent=0 // pred_region
    _
  $region13: #{attention_aggregator.1} parent=0 // pred_fallthru
    _
  // Predicated region
  $region14: #{attention_aggregator.1} parent=0 // pred_check
    _
  $region15: #{attention_aggregator.1} parent=0 // pred_check_branch
    %46 = sbr.rel (0) target = $region17
  $region16: #{attention_aggregator.1} parent=0 // pred_region
    _
  $region17: #{attention_aggregator.1} parent=0 // pred_fallthru
    _

</llo_original>
